<compile_context>
chip_gen: v7x
topology: tpu7x:2x2x1
jax: 0.10.0
libtpu: 0.0.40
codegen_flags: <defaults>
</compile_context>

<pallas_src>
import functools

import jax
import jax.numpy as jnp
from jax import lax
from jax.experimental import pallas as pl
from jax.experimental.pallas import tpu as pltpu


_NEG = -1.0e9  # cross-window mask; exp() underflows to exactly 0.0 in f32


# ----------------------------------------------------------------------------
# Pallas kernel
# ----------------------------------------------------------------------------
def _attend_subtile(q, k, v, extra, gather, scale, out_dtype):
    """One packed sub-tile: q/k/v (R, C) native dtype, extra (R, R) f32."""
    # scores for all windows of the sub-tile in one MXU pass (R = SUB_WIN * N)
    s = lax.dot_general(q, k, (((1,), (1,)), ((), ())),
                        preferred_element_type=jnp.float32)
    s = s * scale + extra                      # bias + shift-mask + block-diag -1e9
    m = jnp.max(s, axis=-1, keepdims=True)
    e = jnp.exp(s - m)                         # off-window entries -> exactly 0.0
    denom = jnp.sum(e, axis=-1, keepdims=True)
    p = e * pl.reciprocal(denom, approx=True)  # EUP reciprocal (free slot)
    # attn @ v : off-window probs are exactly zero, so this is the block-diag
    # (per-window) product; operands stay in v's native dtype for the MXU.
    x = jnp.dot(p.astype(v.dtype), v, preferred_element_type=jnp.float32)
    # extract the per-window (N, N) diagonal blocks: p @ G sums each row's
    # window-block columns (all other entries are exactly 0).
    attn = jnp.dot(p, gather, preferred_element_type=jnp.float32)
    return x.astype(out_dtype), attn


def _window_attn_kernel(*refs, scale, sub_rows, n_sub, shifted):
    if shifted:
        (base_ref, slast_ref, gather_ref, flags_ref,
         q_ref, k_ref, v_ref, x_ref, attn_ref) = refs
    else:
        base_ref, gather_ref, q_ref, k_ref, v_ref, x_ref, attn_ref = refs

    base = base_ref[...]       # (sub_rows, sub_rows) resident: bias blockdiag + -1e9
    gather = gather_ref[...]   # (sub_rows, N)         resident: block-diag extractor

    for s in range(n_sub):     # static unroll over packed sub-tiles of this block
        sl = slice(s * sub_rows, (s + 1) * sub_rows)
        extra = base
        if shifted:
            # per-row flag (1.0 only for the last window of each batch element)
            # times the resident block-diag shift-mask pattern.
            extra = extra + flags_ref[sl, :] * slast_ref[...]
        x, attn = _attend_subtile(q_ref[sl, :], k_ref[sl, :], v_ref[sl, :],
                                  extra, gather, scale, x_ref.dtype)
        x_ref[sl, :] = x
        attn_ref[sl, :] = attn


def _pallas_windowed_attention(q_flat, k_flat, v_flat, base, slast, gather,
                               flags, *, scale, sub_rows, block_rows, shifted):
    """q/k/v_flat: (M, C) with M = B*W; base/slast: (sub_rows, sub_rows);
    gather: (sub_rows, N); flags: (M, 1) or None."""
    M, C = q_flat.shape
    N = gather.shape[1]
    n_blocks = M // block_rows
    n_sub = block_rows // sub_rows

    kernel = functools.partial(_window_attn_kernel, scale=scale,
                               sub_rows=sub_rows, n_sub=n_sub, shifted=shifted)

    const2 = lambda b: (0, 0)   # resident (kept in VMEM across grid steps)
    rowblk = lambda b: (b, 0)

    in_specs = [pl.BlockSpec((sub_rows, sub_rows), const2)]     # base mask
    inputs = [base]
    if shifted:
        in_specs.append(pl.BlockSpec((sub_rows, sub_rows), const2))  # shift pattern
        inputs.append(slast)
    in_specs.append(pl.BlockSpec((sub_rows, N), const2))        # gather matrix
    inputs.append(gather)
    if shifted:
        in_specs.append(pl.BlockSpec((block_rows, 1), rowblk))  # per-row flags
        inputs.append(flags)
    in_specs += [pl.BlockSpec((block_rows, C), rowblk)] * 3     # q, k, v
    inputs += [q_flat, k_flat, v_flat]

    x_flat, attn_flat = pl.pallas_call(
        kernel,
        out_shape=(
            jax.ShapeDtypeStruct((M, C), q_flat.dtype),
            jax.ShapeDtypeStruct((M, N), jnp.float32),
        ),
        grid_spec=pltpu.PrefetchScalarGridSpec(
            num_scalar_prefetch=0,
            grid=(n_blocks,),
            in_specs=in_specs,
            out_specs=[
                pl.BlockSpec((block_rows, C), rowblk),
                pl.BlockSpec((block_rows, N), rowblk),
            ],
        ),
        compiler_params=pltpu.CompilerParams(
            dimension_semantics=("parallel",),
            vmem_limit_bytes=32 * 1024 * 1024,
        ),
    )(*inputs)
    return x_flat, attn_flat


# ----------------------------------------------------------------------------
# Module-equivalent wrapper (glue in plain JAX).
# ----------------------------------------------------------------------------
class WindowedAttentionHead:
    def __init__(self, head_dim, window_size, shift_windows=False, seed=0):
        self.head_dim = head_dim
        self.window_size = window_size
        self.shift_windows = shift_windows
        self.scale = head_dim ** (-0.5)
        self.shift_size = window_size // 2 if shift_windows else 0

        # relative_position_bias_table: (2*window_size - 1, 1)
        # variance_scaling (truncated normal, scale=0.02, fan_in=2*ws-1)
        key = jax.random.PRNGKey(seed)
        fan_in = 2 * window_size - 1
        std = (0.02 / fan_in) ** 0.5 / 0.87962566103423978
        tbl = std * jax.random.truncated_normal(
            key, -2.0, 2.0, (2 * window_size - 1, 1), jnp.float32)
        self.relative_position_bias_table = tbl

        # relative_position_index (1-D): idx[i, j] = i - j + window_size - 1
        i = jnp.arange(window_size)
        self.relative_position_index = (i[:, None] - i[None, :]) + (window_size - 1)

    def _rel_pos_bias(self):
        N = self.window_size
        bias = self.relative_position_bias_table[
            self.relative_position_index.reshape(-1), 0].reshape(N, N)
        return bias  # (N, N)

    def _last_window_mask(self):
        """(N, N) shift mask of the LAST window of each batch element.
        All other windows have an all-zero shift mask."""
        N = self.window_size
        ss = self.shift_size
        seg = jnp.concatenate([jnp.full((N - ss,), 1.0, jnp.float32),
                               jnp.full((ss,), 2.0, jnp.float32)])
        diff = seg[None, :] - seg[:, None]
        return jnp.where(diff != 0, -100.0, 0.0).astype(jnp.float32)

    @staticmethod
    def _choose_tiling(n_windows, N):
        """Pick (sub_win, sub_rows, block_rows):
          sub_win  : windows packed into one MXU score matrix (~128 rows)
          block_rows: rows handled per grid step (several sub-tiles)."""
        row_target = max(128, N)
        sub_win = None
        for d in range(1, n_windows + 1):
            rows = d * N
            if n_windows % d == 0 and rows <= row_target and rows % 8 == 0:
                sub_win = d
        if sub_win is None:           # fall back: single full-size block (legal)
            sub_win = n_windows
        sub_rows = sub_win * N
        n_sub_total = n_windows // sub_win
        max_sub = max(1, min(8, 1024 // sub_rows))
        n_sub_blk = 1
        for d in range(1, n_sub_total + 1):
            if n_sub_total % d == 0 and d <= max_sub:
                n_sub_blk = d
        return sub_win, sub_rows, n_sub_blk * sub_rows

    def __call__(self, q, k, v):
        B, W, C = q.shape
        N = self.window_size
        num_win = W // N
        n_windows = B * num_win
        M = n_windows * N            # == B * W

        if self.shift_size > 0:
            q = jnp.roll(q, -self.shift_size, axis=1)
            k = jnp.roll(k, -self.shift_size, axis=1)
            v = jnp.roll(v, -self.shift_size, axis=1)

        # (B, W, C) row-major == (B*num_win, N, C) row-major == (M, C): free.
        q_flat = q.reshape(M, C)
        k_flat = k.reshape(M, C)
        v_flat = v.reshape(M, C)

        sub_win, sub_rows, block_rows = self._choose_tiling(n_windows, N)

        # Resident combined mask: rel-pos bias on the window-diagonal blocks,
        # -1e9 everywhere else (suppresses cross-window attention after packing).
        bias = self._rel_pos_bias()
        wid = jnp.arange(sub_rows) // N
        same_win = wid[:, None] == wid[None, :]
        base = jnp.where(same_win, jnp.tile(bias, (sub_win, sub_win)),
                         _NEG).astype(jnp.float32)
        # Block-diagonal extractor: (p @ gather)[r, j] = p[r, win(r)*N + j].
        gather = (jnp.arange(sub_rows)[:, None] % N ==
                  jnp.arange(N)[None, :]).astype(jnp.float32)

        shifted = self.shift_size > 0
        if shifted:
            slast = jnp.where(same_win,
                              jnp.tile(self._last_window_mask(),
                                       (sub_win, sub_win)),
                              0.0).astype(jnp.float32)
            row_win = jnp.arange(M) // N
            flags = ((row_win % num_win) == (num_win - 1)
                     ).astype(jnp.float32)[:, None]
        else:
            slast = None
            flags = None

        x_flat, attn_flat = _pallas_windowed_attention(
            q_flat, k_flat, v_flat, base, slast, gather, flags,
            scale=self.scale, sub_rows=sub_rows, block_rows=block_rows,
            shifted=shifted)

        attn = attn_flat.reshape(n_windows, N, N)     # free (contiguous) reshape
        shifted_x = x_flat.reshape(B, W, C)           # free (contiguous) reshape
        if self.shift_size > 0:
            x = jnp.roll(shifted_x, self.shift_size, axis=1)
        else:
            x = shifted_x
        return x, attn


# ----------------------------------------------------------------------------
# Pure-JAX reference (mirrors the PyTorch forward) for a sanity check.
# ----------------------------------------------------------------------------
def _reference(module, q, k, v):
    B, W, C = q.shape
    N = module.window_size
    num_win = W // N
    ss = module.shift_size
    if ss > 0:
        q = jnp.roll(q, -ss, axis=1)
        k = jnp.roll(k, -ss, axis=1)
        v = jnp.roll(v, -ss, axis=1)
    qw = q.reshape(B * num_win, N, C)
    kw = k.reshape(B * num_win, N, C)
    vw = v.reshape(B * num_win, N, C)
    attn = jnp.einsum("bnd,bmd->bnm", qw, kw) * module.scale
    attn = attn + module._rel_pos_bias()[None]
    if ss > 0:
        img = jnp.zeros((W,), jnp.float32)
        img = img.at[W - N:W - ss].set(1.0)
        img = img.at[W - ss:].set(2.0)
        mw = img.reshape(num_win, N)
        mask = mw[:, None, :] - mw[:, :, None]
        mask = jnp.where(mask != 0, -100.0, 0.0)
        attn = (attn.reshape(B, num_win, N, N) + mask[None]).reshape(-1, N, N)
    attn = jax.nn.softmax(attn, axis=-1)
    x = jnp.einsum("bnm,bmd->bnd", attn, vw)
    shifted_x = x.reshape(B, W, C)
    if ss > 0:
        shifted_x = jnp.roll(shifted_x, ss, axis=1)
    return shifted_x, attn


if __name__ == "__main__":
    B, W, head_dim, window_size = 2, 16, 32, 8

    key = jax.random.PRNGKey(0)
    kq, kk, kv = jax.random.split(key, 3)
    q = jax.random.normal(kq, (B, W, head_dim), jnp.float32)
    k = jax.random.normal(kk, (B, W, head_dim), jnp.float32)
    v = jax.random.normal(kv, (B, W, head_dim), jnp.float32)

    # tolerance relaxed vs. f32 reference for the approx (EUP) reciprocal
    TOL = 3e-3
    for shift in (False, True):
        mod = WindowedAttentionHead(head_dim, window_size,
                                    shift_windows=shift, seed=0)
        x, attn = mod(q, k, v)
        jax.block_until_ready((x, attn))
        x_ref, attn_ref = _reference(mod, q, k, v)
        assert jnp.allclose(x, x_ref, atol=TOL, rtol=TOL), (
            f"x mismatch (shift={shift}): {jnp.max(jnp.abs(x - x_ref))}")
        assert jnp.allclose(attn, attn_ref, atol=TOL, rtol=TOL), (
            f"attn mismatch (shift={shift}): {jnp.max(jnp.abs(attn - attn_ref))}")

    print("KERNEL_OK")
</pallas_src>

<mosaic_0001>
module attributes {stable_mosaic.version = 11 : i64} {
  func.func @_window_attn_kernel(%arg0: i32, %arg1: memref<32x32xf32, #tpu.memory_space<vmem>>, %arg2: memref<32x8xf32, #tpu.memory_space<vmem>>, %arg3: memref<32x32xf32, #tpu.memory_space<vmem>>, %arg4: memref<32x32xf32, #tpu.memory_space<vmem>>, %arg5: memref<32x32xf32, #tpu.memory_space<vmem>>, %arg6: memref<32x32xf32, #tpu.memory_space<vmem>>, %arg7: memref<32x8xf32, #tpu.memory_space<vmem>>) attributes {dimension_semantics = [#tpu.dimension_semantics<parallel>], iteration_bounds = array<i64: 1>, scalar_prefetch = 0 : i64, scratch_operands = 0 : i64, tpu.core_type = #tpu.core_type<tc>, window_params = [{pipeline_mode = #tpu.pipeline_mode<synchronous>, transform_indices = @transform_0, window_bounds = array<i64: 32, 32>}, {pipeline_mode = #tpu.pipeline_mode<synchronous>, transform_indices = @transform_1, window_bounds = array<i64: 32, 8>}, {transform_indices = @transform_2, window_bounds = array<i64: 32, 32>}, {transform_indices = @transform_3, window_bounds = array<i64: 32, 32>}, {transform_indices = @transform_4, window_bounds = array<i64: 32, 32>}, {transform_indices = @transform_5, window_bounds = array<i64: 32, 32>}, {transform_indices = @transform_6, window_bounds = array<i64: 32, 8>}]} {
    %c0 = arith.constant 0 : index
    %c0_0 = arith.constant 0 : index
    %0 = vector.load %arg1[%c0, %c0_0] : memref<32x32xf32, #tpu.memory_space<vmem>>, vector<32x32xf32>
    %c0_1 = arith.constant 0 : index
    %c0_2 = arith.constant 0 : index
    %1 = vector.load %arg2[%c0_1, %c0_2] : memref<32x8xf32, #tpu.memory_space<vmem>>, vector<32x8xf32>
    %c0_3 = arith.constant 0 : index
    %c0_4 = arith.constant 0 : index
    %2 = vector.load %arg3[%c0_3, %c0_4] : memref<32x32xf32, #tpu.memory_space<vmem>>, vector<32x32xf32>
    %c0_5 = arith.constant 0 : index
    %c0_6 = arith.constant 0 : index
    %3 = vector.load %arg4[%c0_5, %c0_6] : memref<32x32xf32, #tpu.memory_space<vmem>>, vector<32x32xf32>
    %c0_7 = arith.constant 0 : index
    %c0_8 = arith.constant 0 : index
    %4 = vector.load %arg5[%c0_7, %c0_8] : memref<32x32xf32, #tpu.memory_space<vmem>>, vector<32x32xf32>
    %cst = arith.constant dense<0.000000e+00> : vector<32x32xf32>
    %5 = tpu.matmul %2, %3, %cst {dimension_numbers = #tpu.dot_dimension_numbers<[1], [1], [0], [0], [0, 0, 1, 0], [], []>} : vector<32x32xf32>, vector<32x32xf32>, vector<32x32xf32> -> vector<32x32xf32>
    %cst_9 = arith.constant 0.176776692 : f32
    %6 = vector.broadcast %cst_9 : f32 to vector<32x32xf32>
    %7 = arith.mulf %5, %6 : vector<32x32xf32>
    %8 = arith.addf %7, %0 : vector<32x32xf32>
    %cst_10 = arith.constant dense<0xFF800000> : vector<32xf32>
    %9 = vector.multi_reduction <maximumf>, %8, %cst_10 [1] : vector<32x32xf32> to vector<32xf32>
    %10 = vector.shape_cast %9 : vector<32xf32> to vector<32x1xf32>
    %11 = vector.broadcast %10 : vector<32x1xf32> to vector<32x32xf32>
    %12 = arith.subf %8, %11 : vector<32x32xf32>
    %13 = math.exp %12 : vector<32x32xf32>
    %cst_11 = arith.constant dense<0.000000e+00> : vector<32xf32>
    %14 = vector.multi_reduction <add>, %13, %cst_11 [1] : vector<32x32xf32> to vector<32xf32>
    %15 = vector.shape_cast %14 : vector<32xf32> to vector<32x1xf32>
    %16 = tpu.reciprocal %15 {approx = true} : vector<32x1xf32> -> vector<32x1xf32>
    %17 = vector.broadcast %16 : vector<32x1xf32> to vector<32x32xf32>
    %18 = arith.mulf %13, %17 : vector<32x32xf32>
    %cst_12 = arith.constant dense<0.000000e+00> : vector<32x32xf32>
    %19 = tpu.matmul %18, %4, %cst_12 {dimension_numbers = #tpu.dot_dimension_numbers<[1], [0], [0], [1], [0, 0, 1, 1], [], []>} : vector<32x32xf32>, vector<32x32xf32>, vector<32x32xf32> -> vector<32x32xf32>
    %cst_13 = arith.constant dense<0.000000e+00> : vector<32x8xf32>
    %20 = tpu.matmul %18, %1, %cst_13 {dimension_numbers = #tpu.dot_dimension_numbers<[1], [0], [0], [1], [0, 0, 1, 1], [], []>} : vector<32x32xf32>, vector<32x8xf32>, vector<32x8xf32> -> vector<32x8xf32>
    %c0_14 = arith.constant 0 : index
    %c0_15 = arith.constant 0 : index
    %21 = vector.load %arg6[%c0_14, %c0_15] : memref<32x32xf32, #tpu.memory_space<vmem>>, vector<32x32xf32>
    tpu.vector_store %arg6[%c0_14, %c0_15], %19 {strides = array<i32>} : memref<32x32xf32, #tpu.memory_space<vmem>>, vector<32x32xf32>,
    %c0_16 = arith.constant 0 : index
    %c0_17 = arith.constant 0 : index
    %22 = vector.load %arg7[%c0_16, %c0_17] : memref<32x8xf32, #tpu.memory_space<vmem>>, vector<32x8xf32>
    tpu.vector_store %arg7[%c0_16, %c0_17], %20 {strides = array<i32>} : memref<32x8xf32, #tpu.memory_space<vmem>>, vector<32x8xf32>,
    return
  }
  func.func @transform_0(%arg0: i32) -> (i32, i32) {
    %c0_i32 = arith.constant 0 : i32
    %c0_i32_0 = arith.constant 0 : i32
    %c0_i32_1 = arith.constant 0 : i32
    return %c0_i32, %c0_i32_0 : i32, i32
  }
  func.func @transform_1(%arg0: i32) -> (i32, i32) {
    %c0_i32 = arith.constant 0 : i32
    %c0_i32_0 = arith.constant 0 : i32
    %c0_i32_1 = arith.constant 0 : i32
    return %c0_i32, %c0_i32_0 : i32, i32
  }
  func.func @transform_2(%arg0: i32) -> (i32, i32) {
    %c0_i32 = arith.constant 0 : i32
    %c0_i32_0 = arith.constant 0 : i32
    return %arg0, %c0_i32 : i32, i32
  }
  func.func @transform_3(%arg0: i32) -> (i32, i32) {
    %c0_i32 = arith.constant 0 : i32
    %c0_i32_0 = arith.constant 0 : i32
    return %arg0, %c0_i32 : i32, i32
  }
  func.func @transform_4(%arg0: i32) -> (i32, i32) {
    %c0_i32 = arith.constant 0 : i32
    %c0_i32_0 = arith.constant 0 : i32
    return %arg0, %c0_i32 : i32, i32
  }
  func.func @transform_5(%arg0: i32) -> (i32, i32) {
    %c0_i32 = arith.constant 0 : i32
    %c0_i32_0 = arith.constant 0 : i32
    return %arg0, %c0_i32 : i32, i32
  }
  func.func @transform_6(%arg0: i32) -> (i32, i32) {
    %c0_i32 = arith.constant 0 : i32
    %c0_i32_0 = arith.constant 0 : i32
    return %arg0, %c0_i32 : i32, i32
  }
}

</mosaic_0001>

<llo_original>
// kernel: tpu_custom_call.1
$region0: #{tpu_custom_call.1}
  #allocation0 [shape = 'u32[]', space=smem, size = 0x4, offset = 0x4, fixed_abs, tag = 'smem constant byte address 0x4 - core index']
  #allocation1 [shape = 'u32[144,128]{1,0:T(1,128)}', space=vmem, size = 0x12000, scoped, tag = 'internal scratch']
  %s0 = inlined_call_operand.vmem [shape: f32[32,32], index: 0, kind: input, shape index: {}]
  %s1 = inlined_call_operand.vmem [shape: f32[32,8], index: 1, kind: input, shape index: {}]
  %s2 = inlined_call_operand.hbm [shape: f32[32,32], index: 2, kind: input, shape index: {}]
  %s3 = inlined_call_operand.hbm [shape: f32[32,32], index: 3, kind: input, shape index: {}]
  %s4 = inlined_call_operand.hbm [shape: f32[32,32], index: 4, kind: input, shape index: {}]
  %s5 = inlined_call_operand.hbm [shape: f32[32,32], index: 5, kind: output, shape index: {0}]
  %s6 = inlined_call_operand.vmem [shape: f32[32,8], index: 6, kind: output, shape index: {1}]
  %7 = xla_tuple %s5, %s6
  %s8 = sld [smem:[#allocation0]]
  $region50: #{tpu_custom_call.1} parent=0
    _
  %s10 = ssub.s32 1, %s8
  %s11 = scalar_select 0, %s10, %s8
  $region1: #{tpu_custom_call.1} parent=0
    #allocation2 [shape = 'u8[16384]{0}', space=vmem, size = 0x4000, scoped, tag = 'input window, operand 2, single buffered']
    #allocation3 [shape = 's32[1]{0}', space=sflag, size = 0x4, scoped, tag = 'scoped memory for tpu_custom_call.1']
    #allocation4 [shape = 's32[1]{0}', space=sflag, size = 0x4, scoped, tag = 'scoped memory for tpu_custom_call.1']
    #allocation5 [shape = 'u8[16384]{0}', space=vmem, size = 0x4000, scoped, tag = 'input window, operand 3, single buffered']
    #allocation6 [shape = 's32[1]{0}', space=sflag, size = 0x4, scoped, tag = 'scoped memory for tpu_custom_call.1']
    #allocation7 [shape = 'u8[16384]{0}', space=vmem, size = 0x4000, scoped, tag = 'input window, operand 4, single buffered']
    #allocation8 [shape = 'u8[16384]{0}', space=vmem, size = 0x4000, scoped, tag = 'output window, operand 0, single buffered']
    %12 = vsyncpa [#allocation3], 0
    %13 = vsyncpa [#allocation6], 0
    %14 = vsyncpa [#allocation4], 0
    // Predicated region
    $region2: #{tpu_custom_call.1} parent=1 // pred_check
      _
    $region3: #{tpu_custom_call.1} parent=1 // pred_check_branch
      %16 = sbr.rel (0) target = $region5
    $region4: #{tpu_custom_call.1} parent=1 // pred_region
      _
    $region5: #{tpu_custom_call.1} parent=1 // pred_fallthru
      _
    // Predicated region
    $region6: #{tpu_custom_call.1} parent=1 // pred_check
      _
    $region7: #{tpu_custom_call.1} parent=1 // pred_check_branch
      %18 = sbr.rel (0) target = $region9
    $region8: #{tpu_custom_call.1} parent=1 // pred_region
      _
    $region9: #{tpu_custom_call.1} parent=1 // pred_fallthru
      _
    // Predicated region
    $region10: #{tpu_custom_call.1} parent=1 // pred_check
      _
    $region11: #{tpu_custom_call.1} parent=1 // pred_check_branch
      %20 = sbr.rel (0) target = $region13
    $region12: #{tpu_custom_call.1} parent=1 // pred_region
      %s22 = ssub.s32 512, 512
      %23 = vsyncadd [#allocation3], %s22
      %s24 = sshll.u32 [#allocation2], 4
      %s25 = int_to_ptr.vmem [resolvable:$true] %s24
      %30 = dma.hbm_to_vmem [thread:$0]  %s2, 512, %s25, [#allocation3], 128, 128, 8
    $region13: #{tpu_custom_call.1} parent=1 // pred_fallthru
      _
    // Predicated region
    $region14: #{tpu_custom_call.1} parent=1 // pred_check
      _
    $region15: #{tpu_custom_call.1} parent=1 // pred_check_branch
      %32 = sbr.rel (0) target = $region17
    $region16: #{tpu_custom_call.1} parent=1 // pred_region
      %s34 = ssub.s32 512, 512
      %35 = vsyncadd [#allocation6], %s34
      %s36 = sshll.u32 [#allocation5], 4
      %s37 = int_to_ptr.vmem [resolvable:$true] %s36
      %42 = dma.hbm_to_vmem [thread:$0]  %s3, 512, %s37, [#allocation6], 128, 128, 8
    $region17: #{tpu_custom_call.1} parent=1 // pred_fallthru
      _
    // Predicated region
    $region18: #{tpu_custom_call.1} parent=1 // pred_check
      _
    $region19: #{tpu_custom_call.1} parent=1 // pred_check_branch
      %44 = sbr.rel (0) target = $region21
    $region20: #{tpu_custom_call.1} parent=1 // pred_region
      %s46 = ssub.s32 512, 512
      %47 = vsyncadd [#allocation6], %s46
      %s48 = sshll.u32 [#allocation7], 4
      %s49 = int_to_ptr.vmem [resolvable:$true] %s48
      %54 = dma.hbm_to_vmem [thread:$0]  %s4, 512, %s49, [#allocation6], 128, 128, 8
    $region21: #{tpu_custom_call.1} parent=1 // pred_fallthru
      _
    // Predicated region
    $region22: #{tpu_custom_call.1} parent=1 // pred_check
      _
    $region23: #{tpu_custom_call.1} parent=1 // pred_check_branch
      %56 = sbr.rel (0) target = $region25
    $region24: #{tpu_custom_call.1} parent=1 // pred_region
      %57 = dma.done [#allocation3], 512
    $region25: #{tpu_custom_call.1} parent=1 // pred_fallthru
      _
    // Predicated region
    $region26: #{tpu_custom_call.1} parent=1 // pred_check
      _
    $region27: #{tpu_custom_call.1} parent=1 // pred_check_branch
      %59 = sbr.rel (0) target = $region29
    $region28: #{tpu_custom_call.1} parent=1 // pred_region
      %60 = dma.done [#allocation6], 512
    $region29: #{tpu_custom_call.1} parent=1 // pred_fallthru
      _
    // Predicated region
    $region30: #{tpu_custom_call.1} parent=1 // pred_check
      _
    $region31: #{tpu_custom_call.1} parent=1 // pred_check_branch
      %62 = sbr.rel (0) target = $region33
    $region32: #{tpu_custom_call.1} parent=1 // pred_region
      %63 = dma.done [#allocation6], 512
    $region33: #{tpu_custom_call.1} parent=1 // pred_fallthru
      _
    %v64 = vld [vmem:[%s0] sm:$0xff]
    %v65 = vld [vmem:[%s0 + $0x8] sm:$0xff]
    %v66 = vld [vmem:[%s0 + $0x10] sm:$0xff]
    %v67 = vld [vmem:[%s0 + $0x18] sm:$0xff]
    %v68 = vld [vmem:[%s1] sm:$0xff]
    %v69 = vld [vmem:[%s1 + $0x8] sm:$0xff]
    %v70 = vld [vmem:[%s1 + $0x10] sm:$0xff]
    %v71 = vld [vmem:[%s1 + $0x18] sm:$0xff]
    %v72 = vld [vmem:[#allocation2] sm:$0xff]
    %v73 = vld [vmem:[#allocation2 + $0x8] sm:$0xff]
    %v74 = vld [vmem:[#allocation2 + $0x10] sm:$0xff]
    %v75 = vld [vmem:[#allocation2 + $0x18] sm:$0xff]
    %v76 = vld [vmem:[#allocation5] sm:$0xff]
    %v77 = vld [vmem:[#allocation5 + $0x8] sm:$0xff]
    %v78 = vld [vmem:[#allocation5 + $0x10] sm:$0xff]
    %v79 = vld [vmem:[#allocation5 + $0x18] sm:$0xff]
    %v80 = vld [vmem:[#allocation7] sm:$0xff]
    %v81 = vld [vmem:[#allocation7 + $0x8] sm:$0xff]
    %v82 = vld [vmem:[#allocation7 + $0x10] sm:$0xff]
    %v83 = vld [vmem:[#allocation7 + $0x18] sm:$0xff]
    %vm84 = vcmask 261120
    %v86 = vsel %vm84, %v72, 0
    %v89 = vsel %vm84, %v73, 0
    %v92 = vsel %vm84, %v74, 0
    %v95 = vsel %vm84, %v75, 0
    %v98 = vsel %vm84, %v76, 0
    %v101 = vsel %vm84, %v77, 0
    %v104 = vsel %vm84, %v78, 0
    %v107 = vsel %vm84, %v79, 0
    %109 = vmatprep.subr.mxu0 0.0
    %110 = vmatpush1.xpose.msra.mxu0 %v98
    %111 = vmatprep.subr.mxu0 0.0
    %112 = vmatpush1.xpose.msra.mxu0 %v101
    %113 = vmatprep.subr.mxu0 0.0
    %114 = vmatpush1.xpose.msra.mxu0 %v104
    %115 = vmatprep.subr.mxu0 0.0
    %116 = vmatpush1.xpose.msra.mxu0 %v107
    %117 = vmatprep.subr.mxu0 0.0
    %118 = vmatpush1.xpose.msra.mxu0 0.0
    %119 = vmatprep.subr.mxu0 0.0
    %120 = vmatpush1.xpose.msra.mxu0 0.0
    %121 = vmatprep.subr.mxu0 0.0
    %122 = vmatpush1.xpose.msra.mxu0 0.0
    %123 = vmatprep.subr.mxu0 0.0
    %124 = vmatpush1.xpose.msra.mxu0 0.0
    %125 = vmatprep.subr.mxu0 0.0
    %126 = vmatpush1.xpose.msra.mxu0 0.0
    %127 = vmatprep.subr.mxu0 0.0
    %128 = vmatpush1.xpose.msra.mxu0 0.0
    %129 = vmatprep.subr.mxu0 0.0
    %130 = vmatpush1.xpose.msra.mxu0 0.0
    %131 = vmatprep.subr.mxu0 0.0
    %132 = vmatpush1.xpose.msra.mxu0 0.0
    %133 = vmatprep.subr.mxu0 0.0
    %134 = vmatpush1.xpose.msra.mxu0 0.0
    %135 = vmatprep.subr.mxu0 0.0
    %136 = vmatpush1.xpose.msra.mxu0 0.0
    %137 = vmatprep.subr.mxu0 0.0
    %138 = vmatpush1.xpose.msra.mxu0 0.0
    %139 = vmatprep.subr.mxu0 0.0
    %140 = vmatpush1.xpose.msra.mxu0 0.0
    %141 = vmatprep.subr.mxu0 0.0
    %142 = vmatpush1.xpose.msra.mxu0 0.0
    %143 = vmatprep.subr.mxu0 0.0
    %144 = vmatpush1.xpose.msra.mxu0 0.0
    %145 = vmatprep.subr.mxu0 0.0
    %146 = vmatpush1.xpose.msra.mxu0 0.0
    %147 = vmatprep.subr.mxu0 0.0
    %148 = vmatpush1.xpose.msra.mxu0 0.0
    %149 = vmatprep.subr.mxu0 0.0
    %150 = vmatpush1.xpose.msra.mxu0 0.0
    %151 = vmatprep.subr.mxu0 0.0
    %152 = vmatpush1.xpose.msra.mxu0 0.0
    %153 = vmatprep.subr.mxu0 0.0
    %154 = vmatpush1.xpose.msra.mxu0 0.0
    %155 = vmatprep.subr.mxu0 0.0
    %156 = vmatpush1.xpose.msra.mxu0 0.0
    %157 = vmatprep.subr.mxu0 0.0
    %158 = vmatpush1.xpose.msra.mxu0 0.0
    %159 = vmatprep.subr.mxu0 0.0
    %160 = vmatpush1.xpose.msra.mxu0 0.0
    %161 = vmatprep.subr.mxu0 0.0
    %162 = vmatpush1.xpose.msra.mxu0 0.0
    %163 = vmatprep.subr.mxu0 0.0
    %164 = vmatpush1.xpose.msra.mxu0 0.0
    %165 = vmatprep.subr.mxu0 0.0
    %166 = vmatpush1.xpose.msra.mxu0 0.0
    %167 = vmatprep.subr.mxu0 0.0
    %168 = vmatpush1.xpose.msra.mxu0 0.0
    %169 = vmatprep.subr.mxu0 0.0
    %170 = vmatpush1.xpose.msra.mxu0 0.0
    %171 = vmatprep.subr.mxu0 0.0
    %172 = vmatpush1.xpose.msra.mxu0 0.0
    %173 = vmatprep.mubr.f32.mxu0 0.0
    %174 = vmatmul.mubr.f32.gmra.mrb[0].mxu0 %v86
    %v175 = vpop.f32.mrb[0].mxu0
    %v176 = vadd.f32 0.0, %v175
    %v177 = vpop.f32.mrb[0].mxu0
    %178 = vmatprep.mubr.f32.mxu0 0.0
    %179 = vmatmul.mubr.f32.gmra.mrb[0].mxu0 %v89
    %v180 = vpop.f32.mrb[0].mxu0
    %v181 = vadd.f32 0.0, %v180
    %v182 = vpop.f32.mrb[0].mxu0
    %183 = vmatprep.mubr.f32.mxu0 0.0
    %184 = vmatmul.mubr.f32.gmra.mrb[0].mxu0 %v92
    %v185 = vpop.f32.mrb[0].mxu0
    %v186 = vadd.f32 0.0, %v185
    %v187 = vpop.f32.mrb[0].mxu0
    %188 = vmatprep.mubr.f32.mxu0 0.0
    %189 = vmatmul.mubr.f32.gmra.mrb[0].mxu0 %v95
    %v190 = vpop.f32.mrb[0].mxu0
    %v191 = vadd.f32 0.0, %v190
    %v192 = vpop.f32.mrb[0].mxu0
    %193 = vdwg.mxu0
    %v194 = vmul.f32 %v176, 0.17677669
    %v195 = vmul.f32 %v181, 0.17677669
    %v196 = vmul.f32 %v186, 0.17677669
    %v197 = vmul.f32 %v191, 0.17677669
    %v198 = vadd.f32 %v194, %v64
    %v199 = vadd.f32 %v195, %v65
    %v200 = vadd.f32 %v196, %v66
    %v201 = vadd.f32 %v197, %v67
    %v202 = vsel %vm84, %v198, -inf
    %203 = vmax.xlane.f32.xlu0 %v202
    %v204 = vpop.xlane.xlu0 %203
    %v205 = vsel %vm84, %v199, -inf
    %206 = vmax.xlane.f32.xlu0 %v205
    %v207 = vpop.xlane.xlu0 %206
    %v208 = vsel %vm84, %v200, -inf
    %209 = vmax.xlane.f32.xlu0 %v208
    %v210 = vpop.xlane.xlu0 %209
    %v211 = vsel %vm84, %v201, -inf
    %212 = vmax.xlane.f32.xlu0 %v211
    %v213 = vpop.xlane.xlu0 %212
    %v214 = vsub.f32 %v198, %v204
    %v215 = vsub.f32 %v199, %v207
    %v216 = vsub.f32 %v200, %v210
    %v217 = vsub.f32 %v201, %v213
    %v218 = vmul.f32 %v214, 1.442695
    %v219 = vpow.pop %v218
    %v220 = vmul.f32 %v215, 1.442695
    %v221 = vpow.pop %v220
    %v222 = vmul.f32 %v216, 1.442695
    %v223 = vpow.pop %v222
    %v224 = vmul.f32 %v217, 1.442695
    %v225 = vpow.pop %v224
    %v226 = vsel %vm84, %v219, 0.0
    %227 = vadd.xlane.f32.xlu0 %v226
    %v228 = vpop.xlane.xlu0 %227
    %v229 = vsel %vm84, %v221, 0.0
    %230 = vadd.xlane.f32.xlu0 %v229
    %v231 = vpop.xlane.xlu0 %230
    %v232 = vsel %vm84, %v223, 0.0
    %233 = vadd.xlane.f32.xlu0 %v232
    %v234 = vpop.xlane.xlu0 %233
    %v235 = vsel %vm84, %v225, 0.0
    %236 = vadd.xlane.f32.xlu0 %v235
    %v237 = vpop.xlane.xlu0 %236
    %v238 = vrcp.pop %v228
    %v239 = vrcp.pop %v231
    %v240 = vrcp.pop %v234
    %v241 = vrcp.pop %v237
    %v242 = vmul.f32 %v219, %v238
    %v243 = vmul.f32 %v221, %v239
    %v244 = vmul.f32 %v223, %v240
    %v245 = vmul.f32 %v225, %v241
    %v247 = vsel %vm84, %v242, 0
    %v250 = vsel %vm84, %v243, 0
    %v253 = vsel %vm84, %v244, 0
    %v256 = vsel %vm84, %v245, 0
    %258 = vmatprep.subr.mxu0 0.0
    %259 = vmatpush1.msra.mxu0 %v80
    %260 = vmatprep.subr.mxu0 0.0
    %261 = vmatpush1.msra.mxu0 %v81
    %262 = vmatprep.subr.mxu0 0.0
    %263 = vmatpush1.msra.mxu0 %v82
    %264 = vmatprep.subr.mxu0 0.0
    %265 = vmatpush1.msra.mxu0 %v83
    %266 = vmatprep.subr.mxu0 0.0
    %267 = vmatpush1.msra.mxu0 0.0
    %268 = vmatprep.subr.mxu0 0.0
    %269 = vmatpush1.msra.mxu0 0.0
    %270 = vmatprep.subr.mxu0 0.0
    %271 = vmatpush1.msra.mxu0 0.0
    %272 = vmatprep.subr.mxu0 0.0
    %273 = vmatpush1.msra.mxu0 0.0
    %274 = vmatprep.subr.mxu0 0.0
    %275 = vmatpush1.msra.mxu0 0.0
    %276 = vmatprep.subr.mxu0 0.0
    %277 = vmatpush1.msra.mxu0 0.0
    %278 = vmatprep.subr.mxu0 0.0
    %279 = vmatpush1.msra.mxu0 0.0
    %280 = vmatprep.subr.mxu0 0.0
    %281 = vmatpush1.msra.mxu0 0.0
    %282 = vmatprep.subr.mxu0 0.0
    %283 = vmatpush1.msra.mxu0 0.0
    %284 = vmatprep.subr.mxu0 0.0
    %285 = vmatpush1.msra.mxu0 0.0
    %286 = vmatprep.subr.mxu0 0.0
    %287 = vmatpush1.msra.mxu0 0.0
    %288 = vmatprep.subr.mxu0 0.0
    %289 = vmatpush1.msra.mxu0 0.0
    %290 = vmatprep.subr.mxu0 0.0
    %291 = vmatpush1.msra.mxu0 0.0
    %292 = vmatprep.subr.mxu0 0.0
    %293 = vmatpush1.msra.mxu0 0.0
    %294 = vmatprep.subr.mxu0 0.0
    %295 = vmatpush1.msra.mxu0 0.0
    %296 = vmatprep.subr.mxu0 0.0
    %297 = vmatpush1.msra.mxu0 0.0
    %298 = vmatprep.subr.mxu0 0.0
    %299 = vmatpush1.msra.mxu0 0.0
    %300 = vmatprep.subr.mxu0 0.0
    %301 = vmatpush1.msra.mxu0 0.0
    %302 = vmatprep.subr.mxu0 0.0
    %303 = vmatpush1.msra.mxu0 0.0
    %304 = vmatprep.subr.mxu0 0.0
    %305 = vmatpush1.msra.mxu0 0.0
    %306 = vmatprep.subr.mxu0 0.0
    %307 = vmatpush1.msra.mxu0 0.0
    %308 = vmatprep.subr.mxu0 0.0
    %309 = vmatpush1.msra.mxu0 0.0
    %310 = vmatprep.subr.mxu0 0.0
    %311 = vmatpush1.msra.mxu0 0.0
    %312 = vmatprep.subr.mxu0 0.0
    %313 = vmatpush1.msra.mxu0 0.0
    %314 = vmatprep.subr.mxu0 0.0
    %315 = vmatpush1.msra.mxu0 0.0
    %316 = vmatprep.subr.mxu0 0.0
    %317 = vmatpush1.msra.mxu0 0.0
    %318 = vmatprep.subr.mxu0 0.0
    %319 = vmatpush1.msra.mxu0 0.0
    %320 = vmatprep.subr.mxu0 0.0
    %321 = vmatpush1.msra.mxu0 0.0
    %322 = vmatprep.mubr.f32.mxu0 0.0
    %323 = vmatmul.mubr.f32.gmra.mrb[0].mxu0 %v247
    %v324 = vpop.f32.mrb[0].mxu0
    %v325 = vadd.f32 0.0, %v324
    %v326 = vpop.f32.mrb[0].mxu0
    %327 = vmatprep.mubr.f32.mxu0 0.0
    %328 = vmatmul.mubr.f32.gmra.mrb[0].mxu0 %v250
    %v329 = vpop.f32.mrb[0].mxu0
    %v330 = vadd.f32 0.0, %v329
    %v331 = vpop.f32.mrb[0].mxu0
    %332 = vmatprep.mubr.f32.mxu0 0.0
    %333 = vmatmul.mubr.f32.gmra.mrb[0].mxu0 %v253
    %v334 = vpop.f32.mrb[0].mxu0
    %v335 = vadd.f32 0.0, %v334
    %v336 = vpop.f32.mrb[0].mxu0
    %337 = vmatprep.mubr.f32.mxu0 0.0
    %338 = vmatmul.mubr.f32.gmra.mrb[0].mxu0 %v256
    %v339 = vpop.f32.mrb[0].mxu0
    %v340 = vadd.f32 0.0, %v339
    %v341 = vpop.f32.mrb[0].mxu0
    %342 = vdwg.mxu0
    %343 = vmatprep.subr.mxu0 0.0
    %344 = vmatpush1.msra.mxu0 %v68
    %345 = vmatprep.subr.mxu0 0.0
    %346 = vmatpush1.msra.mxu0 %v69
    %347 = vmatprep.subr.mxu0 0.0
    %348 = vmatpush1.msra.mxu0 %v70
    %349 = vmatprep.subr.mxu0 0.0
    %350 = vmatpush1.msra.mxu0 %v71
    %351 = vmatprep.subr.mxu0 0.0
    %352 = vmatpush1.msra.mxu0 0.0
    %353 = vmatprep.subr.mxu0 0.0
    %354 = vmatpush1.msra.mxu0 0.0
    %355 = vmatprep.subr.mxu0 0.0
    %356 = vmatpush1.msra.mxu0 0.0
    %357 = vmatprep.subr.mxu0 0.0
    %358 = vmatpush1.msra.mxu0 0.0
    %359 = vmatprep.subr.mxu0 0.0
    %360 = vmatpush1.msra.mxu0 0.0
    %361 = vmatprep.subr.mxu0 0.0
    %362 = vmatpush1.msra.mxu0 0.0
    %363 = vmatprep.subr.mxu0 0.0
    %364 = vmatpush1.msra.mxu0 0.0
    %365 = vmatprep.subr.mxu0 0.0
    %366 = vmatpush1.msra.mxu0 0.0
    %367 = vmatprep.subr.mxu0 0.0
    %368 = vmatpush1.msra.mxu0 0.0
    %369 = vmatprep.subr.mxu0 0.0
    %370 = vmatpush1.msra.mxu0 0.0
    %371 = vmatprep.subr.mxu0 0.0
    %372 = vmatpush1.msra.mxu0 0.0
    %373 = vmatprep.subr.mxu0 0.0
    %374 = vmatpush1.msra.mxu0 0.0
    %375 = vmatprep.subr.mxu0 0.0
    %376 = vmatpush1.msra.mxu0 0.0
    %377 = vmatprep.subr.mxu0 0.0
    %378 = vmatpush1.msra.mxu0 0.0
    %379 = vmatprep.subr.mxu0 0.0
    %380 = vmatpush1.msra.mxu0 0.0
    %381 = vmatprep.subr.mxu0 0.0
    %382 = vmatpush1.msra.mxu0 0.0
    %383 = vmatprep.subr.mxu0 0.0
    %384 = vmatpush1.msra.mxu0 0.0
    %385 = vmatprep.subr.mxu0 0.0
    %386 = vmatpush1.msra.mxu0 0.0
    %387 = vmatprep.subr.mxu0 0.0
    %388 = vmatpush1.msra.mxu0 0.0
    %389 = vmatprep.subr.mxu0 0.0
    %390 = vmatpush1.msra.mxu0 0.0
    %391 = vmatprep.subr.mxu0 0.0
    %392 = vmatpush1.msra.mxu0 0.0
    %393 = vmatprep.subr.mxu0 0.0
    %394 = vmatpush1.msra.mxu0 0.0
    %395 = vmatprep.subr.mxu0 0.0
    %396 = vmatpush1.msra.mxu0 0.0
    %397 = vmatprep.subr.mxu0 0.0
    %398 = vmatpush1.msra.mxu0 0.0
    %399 = vmatprep.subr.mxu0 0.0
    %400 = vmatpush1.msra.mxu0 0.0
    %401 = vmatprep.subr.mxu0 0.0
    %402 = vmatpush1.msra.mxu0 0.0
    %403 = vmatprep.subr.mxu0 0.0
    %404 = vmatpush1.msra.mxu0 0.0
    %405 = vmatprep.subr.mxu0 0.0
    %406 = vmatpush1.msra.mxu0 0.0
    %407 = vmatprep.mubr.f32.mxu0 0.0
    %408 = vmatmul.mubr.f32.gmra.mrb[0].mxu0 %v247
    %v409 = vpop.f32.mrb[0].mxu0
    %v410 = vadd.f32 0.0, %v409
    %v411 = vpop.f32.mrb[0].mxu0
    %412 = vmatprep.mubr.f32.mxu0 0.0
    %413 = vmatmul.mubr.f32.gmra.mrb[0].mxu0 %v250
    %v414 = vpop.f32.mrb[0].mxu0
    %v415 = vadd.f32 0.0, %v414
    %v416 = vpop.f32.mrb[0].mxu0
    %417 = vmatprep.mubr.f32.mxu0 0.0
    %418 = vmatmul.mubr.f32.gmra.mrb[0].mxu0 %v253
    %v419 = vpop.f32.mrb[0].mxu0
    %v420 = vadd.f32 0.0, %v419
    %v421 = vpop.f32.mrb[0].mxu0
    %422 = vmatprep.mubr.f32.mxu0 0.0
    %423 = vmatmul.mubr.f32.gmra.mrb[0].mxu0 %v256
    %v424 = vpop.f32.mrb[0].mxu0
    %v425 = vadd.f32 0.0, %v424
    %v426 = vpop.f32.mrb[0].mxu0
    %427 = vdwg.mxu0
    %428 = vst.msk [vmem:[#allocation8] sm:$0xff] %vm84, %v325
    %429 = vst.msk [vmem:[#allocation8 + $0x8] sm:$0xff] %vm84, %v330
    %430 = vst.msk [vmem:[#allocation8 + $0x10] sm:$0xff] %vm84, %v335
    %431 = vst.msk [vmem:[#allocation8 + $0x18] sm:$0xff] %vm84, %v340
    %vm432 = vcmask 64512
    %433 = vst.msk [vmem:[%s6] sm:$0xff] %vm432, %v410
    %434 = vst.msk [vmem:[%s6 + $0x8] sm:$0xff] %vm432, %v415
    %435 = vst.msk [vmem:[%s6 + $0x10] sm:$0xff] %vm432, %v420
    %436 = vst.msk [vmem:[%s6 + $0x18] sm:$0xff] %vm432, %v425
    // Predicated region
    $region34: #{tpu_custom_call.1} parent=1 // pred_check
      _
    $region35: #{tpu_custom_call.1} parent=1 // pred_check_branch
      %438 = sbr.rel (0) target = $region37
    $region36: #{tpu_custom_call.1} parent=1 // pred_region
      %s440 = ssub.s32 512, 512
      %441 = vsyncadd [#allocation4], %s440
      %s442 = sshll.u32 [#allocation8], 4
      %s443 = int_to_ptr.vmem [resolvable:$true] %s442
      %448 = dma.vmem_to_hbm [thread:$0]  %s443, 512, %s5, [#allocation4], 128, 128, 8
    $region37: #{tpu_custom_call.1} parent=1 // pred_fallthru
      _
    // Predicated region
    $region38: #{tpu_custom_call.1} parent=1 // pred_check
      _
    $region39: #{tpu_custom_call.1} parent=1 // pred_check_branch
      %450 = sbr.rel (0) target = $region41
    $region40: #{tpu_custom_call.1} parent=1 // pred_region
      _
    $region41: #{tpu_custom_call.1} parent=1 // pred_fallthru
      _
    // Predicated region
    $region42: #{tpu_custom_call.1} parent=1 // pred_check
      _
    $region43: #{tpu_custom_call.1} parent=1 // pred_check_branch
      %452 = sbr.rel (0) target = $region45
    $region44: #{tpu_custom_call.1} parent=1 // pred_region
      %453 = dma.done [#allocation4], 512
    $region45: #{tpu_custom_call.1} parent=1 // pred_fallthru
      _
    // Predicated region
    $region46: #{tpu_custom_call.1} parent=1 // pred_check
      _
    $region47: #{tpu_custom_call.1} parent=1 // pred_check_branch
      %455 = sbr.rel (0) target = $region49
    $region48: #{tpu_custom_call.1} parent=1 // pred_region
      _
    $region49: #{tpu_custom_call.1} parent=1 // pred_fallthru
      _
    %456 = vsyncpa [#allocation3], 1
    %457 = vsyncpa [#allocation6], 1
    %458 = vsyncpa [#allocation4], 1

</llo_original>
